<compile_context>
chip_gen: v7x
topology: tpu7x:2x2x1
jax: 0.10.0
libtpu: 0.0.40
codegen_flags: <defaults>
</compile_context>

<pallas_src>
import functools

import jax
import jax.numpy as jnp
from jax import lax
from jax.experimental import pallas as pl
from jax.experimental.pallas import tpu as pltpu

_REDUCTIONS = ('mean', 'sum', 'batch-mean', 'none')

_MAX_BLOCK_BYTES = 8 * 1024 * 1024     # per-input block cap (roofline plateau)
_MIN_BLOCK_BYTES = 1 * 1024 * 1024
_VMEM_LIMIT_CAP = 64 * 1024 * 1024     # scoped-VMEM request cap (v5e/v6e)
_DEFAULT_VMEM_CAPACITY = 64 * 1024 * 1024  # most conservative (v7x per-core)


# ---------------------------------------------------------------------------
# Device-aware budgets
# ---------------------------------------------------------------------------
def _vmem_capacity_bytes():
    try:
        cap = int(pltpu.get_tpu_info().vmem_capacity_bytes)
        if cap > 0:
            return cap
    except Exception:
        pass
    return _DEFAULT_VMEM_CAPACITY


def _budgets(reduction, block_bytes_override):
    cap = _vmem_capacity_bytes()
    # Request ~5/8 of physical VMEM (capped): ~40 MiB on v7x, 64 MiB on v5e/v6e.
    vmem_limit = min((cap * 5) // 8, _VMEM_LIMIT_CAP)
    # Arrays in flight (double-buffered): 2 inputs for the reduction path
    # (+tiny output), 3 input-sized arrays for the 'none' path.
    n_bufs = 6 if reduction == 'none' else 4
    blk = vmem_limit // (n_bufs + 1)          # +1 slack for Mosaic internals
    blk = max(_MIN_BLOCK_BYTES, min(_MAX_BLOCK_BYTES, blk))
    if block_bytes_override is not None:      # test hook / manual tuning
        blk = int(block_bytes_override)
    return vmem_limit, blk


# ---------------------------------------------------------------------------
# Tiling plan (copy-free view only; None -> XLA fallback)
# ---------------------------------------------------------------------------
def _plan(total, itemsize, block_bytes):
    lane = None
    for cand in (1024, 512, 256, 128):
        if total % (cand * 8) == 0:
            lane = cand
            break
    if lane is None:
        return None
    rows = total // lane                      # multiple of 8, >= 8
    tr = (block_bytes // (lane * itemsize)) // 8 * 8
    tr = max(8, min(tr, rows))                # no divisor search; remainder OK
    grid = -(-rows // tr)                     # ceil
    return lane, rows, tr, grid


# ---------------------------------------------------------------------------
# Kernels
# ---------------------------------------------------------------------------
def _sq_diff_partial_kernel(p_ref, r_ref, o_ref, *, rows, tr):
    """Per-block partial sums of (pred - real)**2 folded to an (8, lane) slab."""
    d = p_ref[...].astype(jnp.float32) - r_ref[...].astype(jnp.float32)
    dd = d * d
    if rows % tr:  # static: last block is partial -> mask out-of-bounds rows
        rem = rows % tr
        is_last = pl.program_id(0) == pl.num_programs(0) - 1
        row = lax.broadcasted_iota(jnp.int32, dd.shape, 0)
        keep = jnp.logical_or(jnp.logical_not(is_last), row < rem)
        dd = jnp.where(keep, dd, 0.0)
    lane = dd.shape[1]
    # Fold groups of 8 sublanes: pure VPU adds, no XLU reduce, lane-dense store.
    o_ref[...] = jnp.sum(dd.reshape(tr // 8, 8, lane), axis=0)


def _sq_diff_elementwise_kernel(p_ref, r_ref, o_ref):
    """Elementwise (pred - real)**2 for reduction='none'."""
    d = p_ref[...] - r_ref[...]
    o_ref[...] = (d * d).astype(o_ref.dtype)


# ---------------------------------------------------------------------------
# Pure-XLA fallback (shapes with numel % 1024 != 0; rare, roofline-optimal)
# ---------------------------------------------------------------------------
def _xla_fallback(pred, real, reduction):
    if reduction == 'none':
        return (pred - real) ** 2
    d = pred.astype(jnp.float32) - real.astype(jnp.float32)
    s = jnp.sum(d * d)
    if reduction == 'sum':
        return s.astype(pred.dtype)
    if reduction == 'mean':
        return (s / pred.size).astype(pred.dtype)
    return (s / (pred.size // pred.shape[1])).astype(pred.dtype)


# ---------------------------------------------------------------------------
# Wrapper
# ---------------------------------------------------------------------------
@functools.partial(jax.jit, static_argnames=('reduction', 'block_bytes'))
def squared_differences(pred, real, reduction='mean', block_bytes=None):
    assert reduction in _REDUCTIONS
    assert pred.shape == real.shape

    orig_shape = pred.shape
    total = 1
    for s in orig_shape:
        total *= s
    if reduction == 'batch-mean':
        assert len(orig_shape) >= 2, "'batch-mean' requires at least 2-D input"

    itemsize = jnp.dtype(pred.dtype).itemsize
    vmem_limit, blk_bytes = _budgets(reduction, block_bytes)
    plan = _plan(total, itemsize, blk_bytes)

    if plan is None:
        # No copy-free lane/sublane-dense view exists; padding/slicing would
        # add a full extra HBM pass, so let XLA's fused op handle this shape.
        return _xla_fallback(pred, real, reduction)

    lane, rows, tr, grid = plan

    p2 = pred.reshape(rows, lane)   # free bitcast: total == rows * lane
    r2 = real.reshape(rows, lane)

    in_specs = [
        pl.BlockSpec((tr, lane), lambda i: (i, 0)),
        pl.BlockSpec((tr, lane), lambda i: (i, 0)),
    ]
    cparams = pltpu.CompilerParams(
        dimension_semantics=("parallel",),
        vmem_limit_bytes=vmem_limit)

    if reduction == 'none':
        out = pl.pallas_call(
            _sq_diff_elementwise_kernel,
            out_shape=jax.ShapeDtypeStruct((rows, lane), pred.dtype),
            grid_spec=pltpu.PrefetchScalarGridSpec(
                num_scalar_prefetch=0,
                grid=(grid,),
                in_specs=in_specs,
                out_specs=pl.BlockSpec((tr, lane), lambda i: (i, 0)),
            ),
            compiler_params=cparams,
            cost_estimate=pl.CostEstimate(
                flops=2 * total,
                transcendentals=0,
                bytes_accessed=3 * total * itemsize),
        )(p2, r2)
        return out.reshape(orig_shape)

    # Reduction variants: per-block lane-dense partial sums; finish in XLA.
    partials = pl.pallas_call(
        functools.partial(_sq_diff_partial_kernel, rows=rows, tr=tr),
        out_shape=jax.ShapeDtypeStruct((grid * 8, lane), jnp.float32),
        grid_spec=pltpu.PrefetchScalarGridSpec(
            num_scalar_prefetch=0,
            grid=(grid,),
            in_specs=in_specs,
            out_specs=pl.BlockSpec((8, lane), lambda i: (i, 0)),
        ),
        compiler_params=cparams,
        cost_estimate=pl.CostEstimate(
            flops=3 * total,
            transcendentals=0,
            bytes_accessed=2 * total * itemsize + grid * 8 * lane * 4),
    )(p2, r2)
    total_sum = jnp.sum(partials)

    if reduction == 'sum':
        return total_sum.astype(pred.dtype)
    if reduction == 'mean':
        return (total_sum / total).astype(pred.dtype)
    # 'batch-mean': t.sum(dim=1).mean() == total_sum / (numel / size_dim1)
    return (total_sum / (total // orig_shape[1])).astype(pred.dtype)


# ---------------------------------------------------------------------------
# Reference (pure JAX) for verification
# ---------------------------------------------------------------------------
def _ref(pred, real, reduction):
    t = (pred - real) ** 2
    if reduction == 'mean':
        return t.mean()
    if reduction == 'batch-mean':
        return t.sum(axis=1).mean()
    if reduction == 'sum':
        return t.sum()
    return t


if __name__ == "__main__":
    key = jax.random.PRNGKey(0)
    k1, k2, k3, k4, k5, k6 = jax.random.split(key, 6)

    ok = True

    def check(pred, real, reduction, tag, **kw):
        global ok
        out = jax.block_until_ready(
            squared_differences(pred, real, reduction=reduction, **kw))
        ref = _ref(pred, real, reduction)
        if not jnp.allclose(out, ref, rtol=1e-5, atol=1e-5):
            ok = False
            print(f"MISMATCH reduction={reduction} ({tag})")

    # 1) Aligned NCHW shape -> single-block Pallas path, default block sizing.
    pred = jax.random.normal(k1, (2, 4, 16, 16), dtype=jnp.float32)
    real = jax.random.normal(k2, (2, 4, 16, 16), dtype=jnp.float32)
    for r in _REDUCTIONS:
        check(pred, real, r, "aligned")

    # 2) Multi-block grid with a partial last block (forced tiny block size)
    #    exercises the in-kernel remainder mask and boundary output masking.
    pred2 = jax.random.normal(k3, (2, 3, 64, 64), dtype=jnp.float32)
    real2 = jax.random.normal(k4, (2, 3, 64, 64), dtype=jnp.float32)
    for r in _REDUCTIONS:
        check(pred2, real2, r, "partial-last-block", block_bytes=64 * 1024)

    # 3) Awkward shape (numel not a multiple of 8*128) -> fused-XLA fallback.
    pred3 = jax.random.normal(k5, (2, 5, 7, 3), dtype=jnp.float32)
    real3 = jax.random.normal(k6, (2, 5, 7, 3), dtype=jnp.float32)
    for r in _REDUCTIONS:
        check(pred3, real3, r, "fallback")

    if ok:
        print("KERNEL_OK")
</pallas_src>

<mosaic_0001>
module attributes {stable_mosaic.version = 11 : i64} {
  func.func @_sq_diff_partial_kernel(%arg0: i32, %arg1: memref<8x256xf32, #tpu.memory_space<vmem>>, %arg2: memref<8x256xf32, #tpu.memory_space<vmem>>, %arg3: memref<8x256xf32, #tpu.memory_space<vmem>>) attributes {dimension_semantics = [#tpu.dimension_semantics<parallel>], iteration_bounds = array<i64: 1>, scalar_prefetch = 0 : i64, scratch_operands = 0 : i64, tpu.core_type = #tpu.core_type<tc>, window_params = [{transform_indices = @transform_0, window_bounds = array<i64: 8, 256>}, {transform_indices = @transform_1, window_bounds = array<i64: 8, 256>}, {transform_indices = @transform_2, window_bounds = array<i64: 8, 256>}]} {
    %c0 = arith.constant 0 : index
    %c0_0 = arith.constant 0 : index
    %0 = vector.load %arg1[%c0, %c0_0] : memref<8x256xf32, #tpu.memory_space<vmem>>, vector<8x256xf32>
    %c0_1 = arith.constant 0 : index
    %c0_2 = arith.constant 0 : index
    %1 = vector.load %arg2[%c0_1, %c0_2] : memref<8x256xf32, #tpu.memory_space<vmem>>, vector<8x256xf32>
    %2 = arith.subf %0, %1 : vector<8x256xf32>
    %3 = arith.mulf %2, %2 : vector<8x256xf32>
    %4 = vector.shape_cast %3 : vector<8x256xf32> to vector<1x8x256xf32>
    %cst = arith.constant dense<0.000000e+00> : vector<8x256xf32>
    %5 = vector.multi_reduction <add>, %4, %cst [0] : vector<1x8x256xf32> to vector<8x256xf32>
    %c0_3 = arith.constant 0 : index
    %c0_4 = arith.constant 0 : index
    %6 = vector.load %arg3[%c0_3, %c0_4] : memref<8x256xf32, #tpu.memory_space<vmem>>, vector<8x256xf32>
    tpu.vector_store %arg3[%c0_3, %c0_4], %5 {strides = array<i32>} : memref<8x256xf32, #tpu.memory_space<vmem>>, vector<8x256xf32>,
    return
  }
  func.func @transform_0(%arg0: i32) -> (i32, i32) {
    %c0_i32 = arith.constant 0 : i32
    %c0_i32_0 = arith.constant 0 : i32
    return %arg0, %c0_i32 : i32, i32
  }
  func.func @transform_1(%arg0: i32) -> (i32, i32) {
    %c0_i32 = arith.constant 0 : i32
    %c0_i32_0 = arith.constant 0 : i32
    return %arg0, %c0_i32 : i32, i32
  }
  func.func @transform_2(%arg0: i32) -> (i32, i32) {
    %c0_i32 = arith.constant 0 : i32
    %c0_i32_0 = arith.constant 0 : i32
    return %arg0, %c0_i32 : i32, i32
  }
}

</mosaic_0001>

<llo_original>
// kernel: squared_differences.1
$region0: #{squared_differences.1}
  #allocation0 [shape = 'u32[]', space=smem, size = 0x4, offset = 0x4, fixed_abs, tag = 'smem constant byte address 0x4 - core index']
  #allocation1 [shape = 'u32[144,128]{1,0:T(1,128)}', space=vmem, size = 0x12000, scoped, tag = 'internal scratch']
  %s0 = inlined_call_operand.vmem [shape: f32[8,256], index: 0, kind: input, shape index: {}]
  %s1 = inlined_call_operand.vmem [shape: f32[8,256], index: 1, kind: input, shape index: {}]
  %s2 = inlined_call_operand.vmem [shape: f32[8,256], index: 2, kind: output, shape index: {}]
  %s3 = sld [smem:[#allocation0]]
  $region18: #{squared_differences.1} parent=0
    _
  %s5 = ssub.s32 1, %s3
  %s6 = scalar_select 0, %s5, %s3
  // Predicated region
  $region2: #{squared_differences.1} parent=0 // pred_check
    _
  $region3: #{squared_differences.1} parent=0 // pred_check_branch
    %8 = sbr.rel (0) target = $region5
  $region4: #{squared_differences.1} parent=0 // pred_region
    _
  $region5: #{squared_differences.1} parent=0 // pred_fallthru
    _
  // Predicated region
  $region6: #{squared_differences.1} parent=0 // pred_check
    _
  $region7: #{squared_differences.1} parent=0 // pred_check_branch
    %10 = sbr.rel (0) target = $region9
  $region8: #{squared_differences.1} parent=0 // pred_region
    _
  $region9: #{squared_differences.1} parent=0 // pred_fallthru
    _
  %v11 = vld [vmem:[%s0] sm:$0xff]
  %v12 = vld [vmem:[%s0 + $0x8] sm:$0xff]
  %v13 = vld [vmem:[%s1] sm:$0xff]
  %v14 = vld [vmem:[%s1 + $0x8] sm:$0xff]
  %v15 = vsub.f32 %v11, %v13
  %v16 = vsub.f32 %v12, %v14
  %v17 = vmul.f32 %v15, %v15
  %v18 = vmul.f32 %v16, %v16
  %v19 = vadd.f32 %v17, 0.0
  %v20 = vadd.f32 %v18, 0.0
  %21 = vst [vmem:[%s2] sm:$0xff] %v19
  %22 = vst [vmem:[%s2 + $0x8] sm:$0xff] %v20
  // Predicated region
  $region10: #{squared_differences.1} parent=0 // pred_check
    _
  $region11: #{squared_differences.1} parent=0 // pred_check_branch
    %24 = sbr.rel (0) target = $region13
  $region12: #{squared_differences.1} parent=0 // pred_region
    _
  $region13: #{squared_differences.1} parent=0 // pred_fallthru
    _
  // Predicated region
  $region14: #{squared_differences.1} parent=0 // pred_check
    _
  $region15: #{squared_differences.1} parent=0 // pred_check_branch
    %26 = sbr.rel (0) target = $region17
  $region16: #{squared_differences.1} parent=0 // pred_region
    _
  $region17: #{squared_differences.1} parent=0 // pred_fallthru
    _

</llo_original>
